<compile_context>
chip_gen: v6e
topology: v6e:2x2x1
jax: 0.10.0
libtpu: 0.0.40
codegen_flags: <defaults>
</compile_context>

<pallas_src>
import functools

import jax
import jax.numpy as jnp
from jax import lax
from jax.experimental import pallas as pl
from jax.experimental.pallas import tpu as pltpu


# ---------------------------------------------------------------------------
# Fused graph-embedding kernel: one grid step = G graphs packed along lanes.
# ---------------------------------------------------------------------------
def _gemimi_embed_kernel(featT_ref, adjT_ref, w1_ref, w2_ref, p_ref,
                         out_ref, bd_ref, *, iters: int, depth: int,
                         n_graphs: int, n_nodes: int):
    """
    featT_ref : (Fp, L)     L = G*N, columns [g*N:(g+1)*N] = feat_g^T (zero-padded F)
    adjT_ref  : (G, N, N)   compact per-graph adj^T
    w1_ref    : (E, Fp)     zero-padded along F
    w2_ref    : (E, E)
    p_ref     : (D, E, E)   EmbedLayer P matrices
    out_ref   : (E, OPAD)   column g < G = W2 @ sum_n curr_g[:, n]; rest zero
    bd_ref    : (L, L)      VMEM scratch for the block-diagonal adj^T
    """
    G, N = n_graphs, n_nodes
    L = G * N
    OPAD = out_ref.shape[-1]

    # Loop-invariant term = W1 @ feat^T for the whole packed block
    # (one cheap MXU pass; removes the wrapper-side einsum/transpose chain).
    term = jnp.dot(w1_ref[...], featT_ref[...],
                   preferred_element_type=jnp.float32)            # (E, L)

    # Assemble the block-diagonal adj^T once per grid step from the compact
    # (G, N, N) input: G x less HBM traffic than shipping the (L, L) matrix,
    # while keeping the wide (E,L)@(L,L) MXU update per iteration.
    bd_ref[...] = jnp.zeros_like(bd_ref)
    for g in range(G):
        bd_ref[g * N:(g + 1) * N, g * N:(g + 1) * N] = adjT_ref[g]

    def neighbor_fn(prev):
        h = jnp.maximum(
            jnp.dot(p_ref[0], prev, preferred_element_type=jnp.float32), 0.0)
        for d in range(1, depth - 1):
            h = jnp.maximum(
                jnp.dot(p_ref[d], h, preferred_element_type=jnp.float32), 0.0)
        return jnp.dot(p_ref[depth - 1], h,
                       preferred_element_type=jnp.float32)

    if iters <= 0:
        curr = jnp.zeros_like(term)
    else:
        # Iteration 0: prev == 0  =>  neighbor == 0  =>  curr = tanh(term)
        # (bit-identical to the reference — EmbedLayer has no biases).
        curr = jnp.tanh(term)
        for _ in range(iters - 1):
            prev = jnp.dot(curr, bd_ref[...],
                           preferred_element_type=jnp.float32)    # (E, L)
            curr = jnp.tanh(term + neighbor_fn(prev))

    # Node -> graph selector built in-kernel (constant pattern, no HBM input),
    # padded to OPAD lanes so the output writeback is an unmasked lane-dense
    # store; the per-graph node sum rides the MXU.
    l_idx = lax.broadcasted_iota(jnp.int32, (L, OPAD), 0)
    g_idx = lax.broadcasted_iota(jnp.int32, (L, OPAD), 1)
    sel = jnp.where((l_idx >= g_idx * N) & (l_idx < (g_idx + 1) * N),
                    1.0, 0.0).astype(jnp.float32)                 # (L, OPAD)

    gsum = jnp.dot(curr, sel, preferred_element_type=jnp.float32)  # (E, OPAD)
    out_ref[...] = jnp.dot(w2_ref[...], gsum,
                           preferred_element_type=jnp.float32)     # (E, OPAD)


def gemimi_embeddings_pallas(adj, feat, W1, W2, P, iters):
    """adj: (T, N, N), feat: (T, N, F)  ->  graph embeddings (T, E)."""
    T, N, _ = adj.shape
    Fd = feat.shape[-1]
    E = W1.shape[0]
    D = P.shape[0]

    # Pack as many graphs per grid step as fill the 128-lane vreg.  No T//2
    # cap: on v5e/v6e (single TensorCore) it only halved lane packing, and at
    # these per-step sizes one full-width step beats two half-width megacore
    # steps on v7x; large T still yields >= 2 grid steps for megacore.
    G = max(1, min(T, max(1, 128 // max(N, 1))))
    num_blocks = -(-T // G)          # cdiv
    Tp = num_blocks * G
    L = G * N
    OPAD = 128                       # lane-dense output width (unmasked store)
    Fp = ((Fd + 7) // 8) * 8         # pad F with zeros (sublane alignment)

    adj = adj.astype(jnp.float32)
    feat = feat.astype(jnp.float32)
    if Fp != Fd:
        feat = jnp.pad(feat, ((0, 0), (0, 0), (0, Fp - Fd)))
    if Tp != T:                      # pad with zero graphs (-> zero embeddings)
        adj = jnp.concatenate(
            [adj, jnp.zeros((Tp - T, N, N), jnp.float32)], axis=0)
        feat = jnp.concatenate(
            [feat, jnp.zeros((Tp - T, N, Fp), jnp.float32)], axis=0)

    # Packed feat^T: (num_blocks, Fp, L); columns [g*N:(g+1)*N] = feat_g^T.
    featT = feat.reshape(num_blocks, G, N, Fp).transpose(0, 3, 1, 2)
    featT = featT.reshape(num_blocks, Fp, L)

    # Compact per-graph adj^T: (num_blocks, G, N, N); block-diag built in-kernel.
    adjT = jnp.transpose(adj, (0, 2, 1)).reshape(num_blocks, G, N, N)

    W1p = W1.astype(jnp.float32)
    if Fp != Fd:
        W1p = jnp.pad(W1p, ((0, 0), (0, Fp - Fd)))
    W2 = W2.astype(jnp.float32)
    P = P.astype(jnp.float32)

    it = max(int(iters), 0)
    flops = num_blocks * (
        2 * E * Fp * L
        + max(it - 1, 0) * (2 * E * L * L + D * 2 * E * E * L)
        + 2 * E * L * OPAD + 2 * E * E * OPAD)
    transcendentals = num_blocks * it * E * L
    bytes_accessed = 4 * (num_blocks * Fp * L + num_blocks * G * N * N
                          + E * Fp + E * E + D * E * E
                          + num_blocks * E * OPAD)

    kern = functools.partial(_gemimi_embed_kernel, iters=it, depth=D,
                             n_graphs=G, n_nodes=N)
    # NOTE: at larger E/D, add pipeline_mode=pl.Buffered(1) on the invariant
    # W1/W2/P specs and set vmem_limit_bytes for v7x's 64 MiB VMEM; at E=32
    # the whole working set is a few hundred KiB so defaults are fine.
    out = pl.pallas_call(
        kern,
        grid=(num_blocks,),
        in_specs=[
            pl.BlockSpec((pl.Squeezed(), Fp, L), lambda b: (b, 0, 0)),
            pl.BlockSpec((pl.Squeezed(), G, N, N), lambda b: (b, 0, 0, 0)),
            pl.BlockSpec((E, Fp), lambda b: (0, 0)),
            pl.BlockSpec((E, E), lambda b: (0, 0)),
            pl.BlockSpec((D, E, E), lambda b: (0, 0, 0)),
        ],
        out_specs=pl.BlockSpec((pl.Squeezed(), E, OPAD), lambda b: (b, 0, 0)),
        out_shape=jax.ShapeDtypeStruct((num_blocks, E, OPAD), jnp.float32),
        scratch_shapes=[pltpu.VMEM((L, L), jnp.float32)],
        compiler_params=pltpu.CompilerParams(
            dimension_semantics=("parallel",)),
        cost_estimate=pl.CostEstimate(
            flops=int(flops), transcendentals=int(transcendentals),
            bytes_accessed=int(bytes_accessed)),
    )(featT, adjT, W1p, W2, P)

    # (num_blocks, E, OPAD) -> (Tp, E); drop lane padding and padded graphs.
    emb = out[:, :, :G].transpose(0, 2, 1).reshape(Tp, E)
    return emb[:T]


# ---------------------------------------------------------------------------
# Gemimi.forward: fused siamese embedding + cosine tail (plain XLA).
# ---------------------------------------------------------------------------
@functools.partial(jax.jit, static_argnames=("iters",))
def gemimi_forward(g0, g1, y, W1, W2, P, *, iters):
    g0_adj, g0_feat = g0
    g1_adj, g1_feat = g1
    B = g0_adj.shape[0]

    # Single pallas_call for both graph sets (shared W1/W2/P fetch).
    adj = jnp.concatenate([g0_adj, g1_adj], axis=0)
    feat = jnp.concatenate([g0_feat, g1_feat], axis=0)
    emb = gemimi_embeddings_pallas(adj, feat, W1, W2, P, iters)
    e0, e1 = emb[:B], emb[B:]

    eps = 1e-8
    # F.cosine_similarity(e0, e1, dim=0) -> (E,)
    n0 = jnp.maximum(jnp.sqrt(jnp.sum(e0 * e0, axis=0)), eps)
    n1 = jnp.maximum(jnp.sqrt(jnp.sum(e1 * e1, axis=0)), eps)
    sim = jnp.sum(e0 * e1, axis=0) / (n0 * n1)

    # CosineEmbeddingLoss (margin=0, mean): cosine along dim=1 per sample.
    m0 = jnp.maximum(jnp.sqrt(jnp.sum(e0 * e0, axis=1)), eps)
    m1 = jnp.maximum(jnp.sqrt(jnp.sum(e1 * e1, axis=1)), eps)
    cos1 = jnp.sum(e0 * e1, axis=1) / (m0 * m1)
    per = jnp.where(y > 0.0, 1.0 - cos1, jnp.maximum(cos1, 0.0))
    loss = jnp.mean(per)
    return loss, sim


# ---------------------------------------------------------------------------
# Pure-JAX reference (mirrors the PyTorch code) for a correctness check.
# ---------------------------------------------------------------------------
def _ref_graph_embedding(adj, feat, W1, W2, P, iters):
    B, N, _ = adj.shape
    E = W1.shape[0]
    D = P.shape[0]
    featT = jnp.transpose(feat, (0, 2, 1))                     # (B, F, N)
    prev = jnp.zeros((B, E, N), jnp.float32)
    curr = prev
    for _ in range(iters):
        h = jnp.maximum(jnp.einsum('ik,bkn->bin', P[0], prev), 0.0)
        for d in range(1, D - 1):
            h = jnp.maximum(jnp.einsum('ik,bkn->bin', P[d], h), 0.0)
        nb = jnp.einsum('ik,bkn->bin', P[D - 1], h)
        term = jnp.einsum('ik,bkn->bin', W1, featT)
        curr = jnp.tanh(term + nb)
        prev = jnp.transpose(
            jnp.einsum('bik,bkj->bij', adj, jnp.transpose(curr, (0, 2, 1))),
            (0, 2, 1))
    g = jnp.sum(curr, axis=2)                                  # (B, E)
    return (W2 @ g.T).T


def _ref_forward(g0, g1, y, W1, W2, P, iters):
    e0 = _ref_graph_embedding(*g0, W1, W2, P, iters)
    e1 = _ref_graph_embedding(*g1, W1, W2, P, iters)
    eps = 1e-8
    n0 = jnp.maximum(jnp.linalg.norm(e0, axis=0), eps)
    n1 = jnp.maximum(jnp.linalg.norm(e1, axis=0), eps)
    sim = jnp.sum(e0 * e1, axis=0) / (n0 * n1)
    m0 = jnp.maximum(jnp.linalg.norm(e0, axis=1), eps)
    m1 = jnp.maximum(jnp.linalg.norm(e1, axis=1), eps)
    cos1 = jnp.sum(e0 * e1, axis=1) / (m0 * m1)
    per = jnp.where(y > 0.0, 1.0 - cos1, jnp.maximum(cos1, 0.0))
    return jnp.mean(per), sim


if __name__ == "__main__":
    # Small shapes consistent with the module.
    B, N, Fd, E, D, ITER = 2, 16, 9, 32, 2, 3

    key = jax.random.PRNGKey(0)
    k_w1, k_w2, k_p, k_a0, k_f0, k_a1, k_f1 = jax.random.split(key, 7)

    W1 = jax.random.uniform(k_w1, (E, Fd), jnp.float32) * 0.1
    W2 = jax.random.uniform(k_w2, (E, E), jnp.float32) * 0.2
    P = jax.random.normal(k_p, (D, E, E), jnp.float32)          # EmbedLayer P_list

    g0_adj = (jax.random.uniform(k_a0, (B, N, N)) < 0.3).astype(jnp.float32)
    g0_feat = jax.random.normal(k_f0, (B, N, Fd), jnp.float32)
    g1_adj = (jax.random.uniform(k_a1, (B, N, N)) < 0.3).astype(jnp.float32)
    g1_feat = jax.random.normal(k_f1, (B, N, Fd), jnp.float32)
    y = jnp.array([1.0, -1.0], jnp.float32)

    loss, sim = gemimi_forward((g0_adj, g0_feat), (g1_adj, g1_feat), y,
                               W1, W2, P, iters=ITER)
    jax.block_until_ready((loss, sim))

    # Correctness check against a pure-JAX reference of the PyTorch code.
    ref_loss, ref_sim = _ref_forward((g0_adj, g0_feat), (g1_adj, g1_feat), y,
                                     W1, W2, P, ITER)
    assert jnp.allclose(loss, ref_loss, rtol=1e-4, atol=1e-4), (loss, ref_loss)
    assert jnp.allclose(sim, ref_sim, rtol=1e-4, atol=1e-4)
    assert sim.shape == (E,)

    print("KERNEL_OK")
</pallas_src>

<mosaic_0001>
module attributes {stable_mosaic.version = 11 : i64} {
  func.func @_gemimi_embed_kernel(%arg0: i32, %arg1: memref<1x16x64xf32, #tpu.memory_space<vmem>>, %arg2: memref<1x4x16x16xf32, #tpu.memory_space<vmem>>, %arg3: memref<32x16xf32, #tpu.memory_space<vmem>>, %arg4: memref<32x32xf32, #tpu.memory_space<vmem>>, %arg5: memref<2x32x32xf32, #tpu.memory_space<vmem>>, %arg6: memref<1x32x128xf32, #tpu.memory_space<vmem>>, %arg7: memref<64x64xf32, #tpu.memory_space<vmem>>) attributes {dimension_semantics = [#tpu.dimension_semantics<parallel>], iteration_bounds = array<i64: 1>, scalar_prefetch = 0 : i64, scratch_operands = 1 : i64, tpu.core_type = #tpu.core_type<tc>, window_params = [{transform_indices = @transform_0, window_bounds = array<i64: 1, 16, 64>}, {transform_indices = @transform_1, window_bounds = array<i64: 1, 4, 16, 16>}, {pipeline_mode = #tpu.pipeline_mode<synchronous>, transform_indices = @transform_2, window_bounds = array<i64: 32, 16>}, {pipeline_mode = #tpu.pipeline_mode<synchronous>, transform_indices = @transform_3, window_bounds = array<i64: 32, 32>}, {pipeline_mode = #tpu.pipeline_mode<synchronous>, transform_indices = @transform_4, window_bounds = array<i64: 2, 32, 32>}, {transform_indices = @transform_5, window_bounds = array<i64: 1, 32, 128>}]} {
    %c0 = arith.constant 0 : index
    %c0_0 = arith.constant 0 : index
    %0 = vector.load %arg3[%c0, %c0_0] : memref<32x16xf32, #tpu.memory_space<vmem>>, vector<32x16xf32>
    %c0_1 = arith.constant 0 : index
    %c0_2 = arith.constant 0 : index
    %c0_3 = arith.constant 0 : index
    %1 = vector.load %arg1[%c0_1, %c0_2, %c0_3] : memref<1x16x64xf32, #tpu.memory_space<vmem>>, vector<1x16x64xf32>
    %2 = vector.shape_cast %1 : vector<1x16x64xf32> to vector<16x64xf32>
    %cst = arith.constant dense<0.000000e+00> : vector<32x64xf32>
    %3 = tpu.matmul %0, %2, %cst {dimension_numbers = #tpu.dot_dimension_numbers<[1], [0], [0], [1], [0, 0, 1, 1], [], []>} : vector<32x16xf32>, vector<16x64xf32>, vector<32x64xf32> -> vector<32x64xf32>
    %cst_4 = arith.constant 0.000000e+00 : f32
    %4 = vector.broadcast %cst_4 : f32 to vector<64x64xf32>
    %c0_5 = arith.constant 0 : index
    %c0_6 = arith.constant 0 : index
    %5 = vector.load %arg7[%c0_5, %c0_6] : memref<64x64xf32, #tpu.memory_space<vmem>>, vector<64x64xf32>
    tpu.vector_store %arg7[%c0_5, %c0_6], %4 {strides = array<i32>} : memref<64x64xf32, #tpu.memory_space<vmem>>, vector<64x64xf32>,
    %c0_7 = arith.constant 0 : index
    %c0_8 = arith.constant 0 : index
    %c0_9 = arith.constant 0 : index
    %c0_10 = arith.constant 0 : index
    %6 = vector.load %arg2[%c0_7, %c0_8, %c0_9, %c0_10] : memref<1x4x16x16xf32, #tpu.memory_space<vmem>>, vector<1x1x16x16xf32>
    %7 = vector.shape_cast %6 : vector<1x1x16x16xf32> to vector<16x16xf32>
    %c0_11 = arith.constant 0 : index
    %c0_12 = arith.constant 0 : index
    %8 = vector.load %arg7[%c0_11, %c0_12] : memref<64x64xf32, #tpu.memory_space<vmem>>, vector<16x16xf32>
    tpu.vector_store %arg7[%c0_11, %c0_12], %7 {strides = array<i32>} : memref<64x64xf32, #tpu.memory_space<vmem>>, vector<16x16xf32>,
    %c0_13 = arith.constant 0 : index
    %c1 = arith.constant 1 : index
    %c0_14 = arith.constant 0 : index
    %c0_15 = arith.constant 0 : index
    %9 = vector.load %arg2[%c0_13, %c1, %c0_14, %c0_15] : memref<1x4x16x16xf32, #tpu.memory_space<vmem>>, vector<1x1x16x16xf32>
    %10 = vector.shape_cast %9 : vector<1x1x16x16xf32> to vector<16x16xf32>
    %c16 = arith.constant 16 : index
    %c16_16 = arith.constant 16 : index
    %11 = vector.load %arg7[%c16, %c16_16] : memref<64x64xf32, #tpu.memory_space<vmem>>, vector<16x16xf32>
    tpu.vector_store %arg7[%c16, %c16_16], %10 {strides = array<i32>} : memref<64x64xf32, #tpu.memory_space<vmem>>, vector<16x16xf32>,
    %c0_17 = arith.constant 0 : index
    %c2 = arith.constant 2 : index
    %c0_18 = arith.constant 0 : index
    %c0_19 = arith.constant 0 : index
    %12 = vector.load %arg2[%c0_17, %c2, %c0_18, %c0_19] : memref<1x4x16x16xf32, #tpu.memory_space<vmem>>, vector<1x1x16x16xf32>
    %13 = vector.shape_cast %12 : vector<1x1x16x16xf32> to vector<16x16xf32>
    %c32 = arith.constant 32 : index
    %c32_20 = arith.constant 32 : index
    %14 = vector.load %arg7[%c32, %c32_20] : memref<64x64xf32, #tpu.memory_space<vmem>>, vector<16x16xf32>
    tpu.vector_store %arg7[%c32, %c32_20], %13 {strides = array<i32>} : memref<64x64xf32, #tpu.memory_space<vmem>>, vector<16x16xf32>,
    %c0_21 = arith.constant 0 : index
    %c3 = arith.constant 3 : index
    %c0_22 = arith.constant 0 : index
    %c0_23 = arith.constant 0 : index
    %15 = vector.load %arg2[%c0_21, %c3, %c0_22, %c0_23] : memref<1x4x16x16xf32, #tpu.memory_space<vmem>>, vector<1x1x16x16xf32>
    %16 = vector.shape_cast %15 : vector<1x1x16x16xf32> to vector<16x16xf32>
    %c48 = arith.constant 48 : index
    %c48_24 = arith.constant 48 : index
    %17 = vector.load %arg7[%c48, %c48_24] : memref<64x64xf32, #tpu.memory_space<vmem>>, vector<16x16xf32>
    tpu.vector_store %arg7[%c48, %c48_24], %16 {strides = array<i32>} : memref<64x64xf32, #tpu.memory_space<vmem>>, vector<16x16xf32>,
    %18 = math.tanh %3 : vector<32x64xf32>
    %c0_25 = arith.constant 0 : index
    %c0_26 = arith.constant 0 : index
    %19 = vector.load %arg7[%c0_25, %c0_26] : memref<64x64xf32, #tpu.memory_space<vmem>>, vector<64x64xf32>
    %cst_27 = arith.constant dense<0.000000e+00> : vector<32x64xf32>
    %20 = tpu.matmul %18, %19, %cst_27 {dimension_numbers = #tpu.dot_dimension_numbers<[1], [0], [0], [1], [0, 0, 1, 1], [], []>} : vector<32x64xf32>, vector<64x64xf32>, vector<32x64xf32> -> vector<32x64xf32>
    %c0_28 = arith.constant 0 : index
    %c0_29 = arith.constant 0 : index
    %c0_30 = arith.constant 0 : index
    %21 = vector.load %arg5[%c0_28, %c0_29, %c0_30] : memref<2x32x32xf32, #tpu.memory_space<vmem>>, vector<1x32x32xf32>
    %22 = vector.shape_cast %21 : vector<1x32x32xf32> to vector<32x32xf32>
    %cst_31 = arith.constant dense<0.000000e+00> : vector<32x64xf32>
    %23 = tpu.matmul %22, %20, %cst_31 {dimension_numbers = #tpu.dot_dimension_numbers<[1], [0], [0], [1], [0, 0, 1, 1], [], []>} : vector<32x32xf32>, vector<32x64xf32>, vector<32x64xf32> -> vector<32x64xf32>
    %cst_32 = arith.constant 0.000000e+00 : f32
    %24 = vector.broadcast %cst_32 : f32 to vector<32x64xf32>
    %25 = arith.maximumf %23, %24 : vector<32x64xf32>
    %c1_33 = arith.constant 1 : index
    %c0_34 = arith.constant 0 : index
    %c0_35 = arith.constant 0 : index
    %26 = vector.load %arg5[%c1_33, %c0_34, %c0_35] : memref<2x32x32xf32, #tpu.memory_space<vmem>>, vector<1x32x32xf32>
    %27 = vector.shape_cast %26 : vector<1x32x32xf32> to vector<32x32xf32>
    %cst_36 = arith.constant dense<0.000000e+00> : vector<32x64xf32>
    %28 = tpu.matmul %27, %25, %cst_36 {dimension_numbers = #tpu.dot_dimension_numbers<[1], [0], [0], [1], [0, 0, 1, 1], [], []>} : vector<32x32xf32>, vector<32x64xf32>, vector<32x64xf32> -> vector<32x64xf32>
    %29 = arith.addf %3, %28 : vector<32x64xf32>
    %30 = math.tanh %29 : vector<32x64xf32>
    %c0_37 = arith.constant 0 : index
    %c0_38 = arith.constant 0 : index
    %31 = vector.load %arg7[%c0_37, %c0_38] : memref<64x64xf32, #tpu.memory_space<vmem>>, vector<64x64xf32>
    %cst_39 = arith.constant dense<0.000000e+00> : vector<32x64xf32>
    %32 = tpu.matmul %30, %31, %cst_39 {dimension_numbers = #tpu.dot_dimension_numbers<[1], [0], [0], [1], [0, 0, 1, 1], [], []>} : vector<32x64xf32>, vector<64x64xf32>, vector<32x64xf32> -> vector<32x64xf32>
    %c0_40 = arith.constant 0 : index
    %c0_41 = arith.constant 0 : index
    %c0_42 = arith.constant 0 : index
    %33 = vector.load %arg5[%c0_40, %c0_41, %c0_42] : memref<2x32x32xf32, #tpu.memory_space<vmem>>, vector<1x32x32xf32>
    %34 = vector.shape_cast %33 : vector<1x32x32xf32> to vector<32x32xf32>
    %cst_43 = arith.constant dense<0.000000e+00> : vector<32x64xf32>
    %35 = tpu.matmul %34, %32, %cst_43 {dimension_numbers = #tpu.dot_dimension_numbers<[1], [0], [0], [1], [0, 0, 1, 1], [], []>} : vector<32x32xf32>, vector<32x64xf32>, vector<32x64xf32> -> vector<32x64xf32>
    %cst_44 = arith.constant 0.000000e+00 : f32
    %36 = vector.broadcast %cst_44 : f32 to vector<32x64xf32>
    %37 = arith.maximumf %35, %36 : vector<32x64xf32>
    %c1_45 = arith.constant 1 : index
    %c0_46 = arith.constant 0 : index
    %c0_47 = arith.constant 0 : index
    %38 = vector.load %arg5[%c1_45, %c0_46, %c0_47] : memref<2x32x32xf32, #tpu.memory_space<vmem>>, vector<1x32x32xf32>
    %39 = vector.shape_cast %38 : vector<1x32x32xf32> to vector<32x32xf32>
    %cst_48 = arith.constant dense<0.000000e+00> : vector<32x64xf32>
    %40 = tpu.matmul %39, %37, %cst_48 {dimension_numbers = #tpu.dot_dimension_numbers<[1], [0], [0], [1], [0, 0, 1, 1], [], []>} : vector<32x32xf32>, vector<32x64xf32>, vector<32x64xf32> -> vector<32x64xf32>
    %41 = arith.addf %3, %40 : vector<32x64xf32>
    %42 = math.tanh %41 : vector<32x64xf32>
    %43 = tpu.iota {dimensions = array<i32: 0>} : vector<64x128xi32>
    %44 = tpu.iota {dimensions = array<i32: 1>} : vector<64x128xi32>
    %c16_i32 = arith.constant 16 : i32
    %45 = vector.broadcast %c16_i32 : i32 to vector<64x128xi32>
    %46 = arith.muli %44, %45 : vector<64x128xi32>
    %47 = arith.cmpi sge, %43, %46 : vector<64x128xi32>
    %c1_i32 = arith.constant 1 : i32
    %48 = vector.broadcast %c1_i32 : i32 to vector<64x128xi32>
    %49 = arith.addi %44, %48 : vector<64x128xi32>
    %c16_i32_49 = arith.constant 16 : i32
    %50 = vector.broadcast %c16_i32_49 : i32 to vector<64x128xi32>
    %51 = arith.muli %49, %50 : vector<64x128xi32>
    %52 = arith.cmpi slt, %43, %51 : vector<64x128xi32>
    %53 = arith.andi %47, %52 : vector<64x128xi1>
    %cst_50 = arith.constant 1.000000e+00 : f32
    %cst_51 = arith.constant 0.000000e+00 : f32
    %54 = vector.broadcast %cst_50 : f32 to vector<64x128xf32>
    %55 = vector.broadcast %cst_51 : f32 to vector<64x128xf32>
    %56 = arith.select %53, %54, %55 : vector<64x128xi1>, vector<64x128xf32>
    %cst_52 = arith.constant dense<0.000000e+00> : vector<32x128xf32>
    %57 = tpu.matmul %42, %56, %cst_52 {dimension_numbers = #tpu.dot_dimension_numbers<[1], [0], [0], [1], [0, 0, 1, 1], [], []>} : vector<32x64xf32>, vector<64x128xf32>, vector<32x128xf32> -> vector<32x128xf32>
    %c0_53 = arith.constant 0 : index
    %c0_54 = arith.constant 0 : index
    %58 = vector.load %arg4[%c0_53, %c0_54] : memref<32x32xf32, #tpu.memory_space<vmem>>, vector<32x32xf32>
    %cst_55 = arith.constant dense<0.000000e+00> : vector<32x128xf32>
    %59 = tpu.matmul %58, %57, %cst_55 {dimension_numbers = #tpu.dot_dimension_numbers<[1], [0], [0], [1], [0, 0, 1, 1], [], []>} : vector<32x32xf32>, vector<32x128xf32>, vector<32x128xf32> -> vector<32x128xf32>
    %c0_56 = arith.constant 0 : index
    %c0_57 = arith.constant 0 : index
    %c0_58 = arith.constant 0 : index
    %60 = vector.load %arg6[%c0_56, %c0_57, %c0_58] : memref<1x32x128xf32, #tpu.memory_space<vmem>>, vector<1x32x128xf32>
    %61 = vector.shape_cast %60 : vector<1x32x128xf32> to vector<32x128xf32>
    %62 = vector.shape_cast %59 : vector<32x128xf32> to vector<1x32x128xf32>
    tpu.vector_store %arg6[%c0_56, %c0_57, %c0_58], %62 {strides = array<i32>} : memref<1x32x128xf32, #tpu.memory_space<vmem>>, vector<1x32x128xf32>,
    return
  }
  func.func @transform_0(%arg0: i32) -> (i32, i32, i32) {
    %c0_i32 = arith.constant 0 : i32
    %c0_i32_0 = arith.constant 0 : i32
    %c0_i32_1 = arith.constant 0 : i32
    return %arg0, %c0_i32, %c0_i32_0 : i32, i32, i32
  }
  func.func @transform_1(%arg0: i32) -> (i32, i32, i32, i32) {
    %c0_i32 = arith.constant 0 : i32
    %c0_i32_0 = arith.constant 0 : i32
    %c0_i32_1 = arith.constant 0 : i32
    %c0_i32_2 = arith.constant 0 : i32
    return %arg0, %c0_i32, %c0_i32_0, %c0_i32_1 : i32, i32, i32, i32
  }
  func.func @transform_2(%arg0: i32) -> (i32, i32) {
    %c0_i32 = arith.constant 0 : i32
    %c0_i32_0 = arith.constant 0 : i32
    %c0_i32_1 = arith.constant 0 : i32
    return %c0_i32, %c0_i32_0 : i32, i32
  }
  func.func @transform_3(%arg0: i32) -> (i32, i32) {
    %c0_i32 = arith.constant 0 : i32
    %c0_i32_0 = arith.constant 0 : i32
    %c0_i32_1 = arith.constant 0 : i32
    return %c0_i32, %c0_i32_0 : i32, i32
  }
  func.func @transform_4(%arg0: i32) -> (i32, i32, i32) {
    %c0_i32 = arith.constant 0 : i32
    %c0_i32_0 = arith.constant 0 : i32
    %c0_i32_1 = arith.constant 0 : i32
    %c0_i32_2 = arith.constant 0 : i32
    return %c0_i32, %c0_i32_0, %c0_i32_1 : i32, i32, i32
  }
  func.func @transform_5(%arg0: i32) -> (i32, i32, i32) {
    %c0_i32 = arith.constant 0 : i32
    %c0_i32_0 = arith.constant 0 : i32
    %c0_i32_1 = arith.constant 0 : i32
    return %arg0, %c0_i32, %c0_i32_0 : i32, i32, i32
  }
}

</mosaic_0001>

<llo_original>
// kernel: gemimi_forward.1
$region0: #{gemimi_forward.1}
  #allocation0 [shape = 'u32[]', space=smem, size = 0x4, offset = 0x4, fixed_abs, tag = 'smem constant byte address 0x4 - core index']
  #allocation1 [shape = 'u32[144,128]{1,0:T(1,128)}', space=vmem, size = 0x12000, scoped, tag = 'internal scratch']
  #allocation2 [shape = 'f32[64,64]{1,0:T(8,128)}', space=vmem, size = 0x8000, scoped, tag = 'scratch operand']
  %s0 = inlined_call_operand.vmem [shape: f32[1,16,64], index: 0, kind: input, shape index: {}]
  %s1 = inlined_call_operand.vmem [shape: f32[1,4,16,16], index: 1, kind: input, shape index: {}]
  %s2 = inlined_call_operand.vmem [shape: f32[32,16], index: 2, kind: input, shape index: {}]
  %s3 = inlined_call_operand.vmem [shape: f32[32,32], index: 3, kind: input, shape index: {}]
  %s4 = inlined_call_operand.vmem [shape: f32[2,32,32], index: 4, kind: input, shape index: {}]
  %s5 = inlined_call_operand.vmem [shape: f32[1,32,128], index: 5, kind: output, shape index: {}]
  %s6 = sld [smem:[#allocation0]]
  $region30: #{gemimi_forward.1} parent=0
    _
  %s8 = ssub.s32 1, %s6
  %s9 = scalar_select 0, %s8, %s6
  // Predicated region
  $region2: #{gemimi_forward.1} parent=0 // pred_check
    _
  $region3: #{gemimi_forward.1} parent=0 // pred_check_branch
    %11 = sbr.rel (0) target = $region5
  $region4: #{gemimi_forward.1} parent=0 // pred_region
    _
  $region5: #{gemimi_forward.1} parent=0 // pred_fallthru
    _
  // Predicated region
  $region6: #{gemimi_forward.1} parent=0 // pred_check
    _
  $region7: #{gemimi_forward.1} parent=0 // pred_check_branch
    %13 = sbr.rel (0) target = $region9
  $region8: #{gemimi_forward.1} parent=0 // pred_region
    _
  $region9: #{gemimi_forward.1} parent=0 // pred_fallthru
    _
  // Predicated region
  $region10: #{gemimi_forward.1} parent=0 // pred_check
    _
  $region11: #{gemimi_forward.1} parent=0 // pred_check_branch
    %15 = sbr.rel (0) target = $region13
  $region12: #{gemimi_forward.1} parent=0 // pred_region
    _
  $region13: #{gemimi_forward.1} parent=0 // pred_fallthru
    _
  // Predicated region
  $region14: #{gemimi_forward.1} parent=0 // pred_check
    _
  $region15: #{gemimi_forward.1} parent=0 // pred_check_branch
    %17 = sbr.rel (0) target = $region17
  $region16: #{gemimi_forward.1} parent=0 // pred_region
    _
  $region17: #{gemimi_forward.1} parent=0 // pred_fallthru
    _
  // Predicated region
  $region18: #{gemimi_forward.1} parent=0 // pred_check
    _
  $region19: #{gemimi_forward.1} parent=0 // pred_check_branch
    %19 = sbr.rel (0) target = $region21
  $region20: #{gemimi_forward.1} parent=0 // pred_region
    _
  $region21: #{gemimi_forward.1} parent=0 // pred_fallthru
    _
  %v20 = vld [vmem:[%s2] sm:$0xff]
  %v21 = vld [vmem:[%s2 + $0x8] sm:$0xff]
  %v22 = vld [vmem:[%s2 + $0x10] sm:$0xff]
  %v23 = vld [vmem:[%s2 + $0x18] sm:$0xff]
  %v24 = vld [vmem:[%s0] sm:$0xff]
  %v25 = vld [vmem:[%s0 + $0x8] sm:$0xff]
  %vm26 = vcmask 130048
  %v28 = vsel %vm26, %v20, 0
  %v31 = vsel %vm26, %v21, 0
  %v34 = vsel %vm26, %v22, 0
  %v37 = vsel %vm26, %v23, 0
  %39 = vmatprep.subr.mxu0 0.0
  %40 = vmatpush1.msra.mxu0 0.0
  %41 = vmatprep.subr.mxu0 0.0
  %42 = vmatpush1.msra.mxu0 0.0
  %43 = vmatprep.subr.mxu0 0.0
  %44 = vmatpush1.msra.mxu0 0.0
  %45 = vmatprep.subr.mxu0 0.0
  %46 = vmatpush1.msra.mxu0 0.0
  %47 = vmatprep.subr.mxu0 0.0
  %48 = vmatpush1.msra.mxu0 0.0
  %49 = vmatprep.subr.mxu0 0.0
  %50 = vmatpush1.msra.mxu0 0.0
  %51 = vmatprep.subr.mxu0 0.0
  %52 = vmatpush1.msra.mxu0 0.0
  %53 = vmatprep.subr.mxu0 0.0
  %54 = vmatpush1.msra.mxu0 0.0
  %55 = vmatprep.subr.mxu0 0.0
  %56 = vmatpush1.msra.mxu0 0.0
  %57 = vmatprep.subr.mxu0 0.0
  %58 = vmatpush1.msra.mxu0 0.0
  %59 = vmatprep.subr.mxu0 0.0
  %60 = vmatpush1.msra.mxu0 0.0
  %61 = vmatprep.subr.mxu0 0.0
  %62 = vmatpush1.msra.mxu0 0.0
  %63 = vmatprep.subr.mxu0 0.0
  %64 = vmatpush1.msra.mxu0 0.0
  %65 = vmatprep.subr.mxu0 0.0
  %66 = vmatpush1.msra.mxu0 0.0
  %67 = vmatprep.subr.mxu0 0.0
  %68 = vmatpush1.msra.mxu0 %v25
  %69 = vmatprep.subr.mxu0 0.0
  %70 = vmatpush1.msra.mxu0 %v24
  %71 = vmatprep.subr.mxu0 0.0
  %72 = vmatpush2.msra.mxu0 0.0
  %73 = vmatprep.subr.mxu0 0.0
  %74 = vmatpush2.msra.mxu0 0.0
  %75 = vmatprep.subr.mxu0 0.0
  %76 = vmatpush2.msra.mxu0 0.0
  %77 = vmatprep.subr.mxu0 0.0
  %78 = vmatpush2.msra.mxu0 0.0
  %79 = vmatprep.subr.mxu0 0.0
  %80 = vmatpush2.msra.mxu0 0.0
  %81 = vmatprep.subr.mxu0 0.0
  %82 = vmatpush2.msra.mxu0 0.0
  %83 = vmatprep.subr.mxu0 0.0
  %84 = vmatpush2.msra.mxu0 0.0
  %85 = vmatprep.subr.mxu0 0.0
  %86 = vmatpush2.msra.mxu0 0.0
  %87 = vmatprep.subr.mxu0 0.0
  %88 = vmatpush2.msra.mxu0 0.0
  %89 = vmatprep.subr.mxu0 0.0
  %90 = vmatpush2.msra.mxu0 0.0
  %91 = vmatprep.subr.mxu0 0.0
  %92 = vmatpush2.msra.mxu0 0.0
  %93 = vmatprep.subr.mxu0 0.0
  %94 = vmatpush2.msra.mxu0 0.0
  %95 = vmatprep.subr.mxu0 0.0
  %96 = vmatpush2.msra.mxu0 0.0
  %97 = vmatprep.subr.mxu0 0.0
  %98 = vmatpush2.msra.mxu0 0.0
  %99 = vmatprep.subr.mxu0 0.0
  %100 = vmatpush2.msra.mxu0 0.0
  %101 = vmatprep.subr.mxu0 0.0
  %102 = vmatpush2.msra.mxu0 0.0
  %103 = vmatprep.mubr.f32.mxu0 0.0
  %104 = vmatmul.mubr.f32.gmra.mxu0 %v28
  %v105 = vpop.f32.mrf.mxu0
  %v106 = vadd.f32 0.0, %v105
  %v107 = vpop.f32.mrf.mxu0
  %108 = vmatprep.mubr.f32.mxu0 0.0
  %109 = vmatmul.mubr.f32.gmra.mxu0 %v31
  %v110 = vpop.f32.mrf.mxu0
  %v111 = vadd.f32 0.0, %v110
  %v112 = vpop.f32.mrf.mxu0
  %113 = vmatprep.mubr.f32.mxu0 0.0
  %114 = vmatmul.mubr.f32.gmra.mxu0 %v34
  %v115 = vpop.f32.mrf.mxu0
  %v116 = vadd.f32 0.0, %v115
  %v117 = vpop.f32.mrf.mxu0
  %118 = vmatprep.mubr.f32.mxu0 0.0
  %119 = vmatmul.mubr.f32.gmra.mxu0 %v37
  %v120 = vpop.f32.mrf.mxu0
  %v121 = vadd.f32 0.0, %v120
  %v122 = vpop.f32.mrf.mxu0
  %123 = vdwg.mxu0
  %vm124 = vcmask 523264
  %125 = vst.msk [vmem:[#allocation2] sm:$0xff] %vm124, 0.0
  %126 = vst.msk [vmem:[#allocation2 + $0x8] sm:$0xff] %vm124, 0.0
  %127 = vst.msk [vmem:[#allocation2 + $0x10] sm:$0xff] %vm124, 0.0
  %128 = vst.msk [vmem:[#allocation2 + $0x18] sm:$0xff] %vm124, 0.0
  %129 = vst.msk [vmem:[#allocation2 + $0x20] sm:$0xff] %vm124, 0.0
  %130 = vst.msk [vmem:[#allocation2 + $0x28] sm:$0xff] %vm124, 0.0
  %131 = vst.msk [vmem:[#allocation2 + $0x30] sm:$0xff] %vm124, 0.0
  %132 = vst.msk [vmem:[#allocation2 + $0x38] sm:$0xff] %vm124, 0.0
  %v133 = vld [vmem:[%s1] sm:$0xff]
  %v134 = vld [vmem:[%s1 + $0x8] sm:$0xff]
  %135 = vst.msk [vmem:[#allocation2] sm:$0xff] %vm26, %v133
  %136 = vst.msk [vmem:[#allocation2 + $0x8] sm:$0xff] %vm26, %v134
  %s137 = scalar_lea.vmem %s1, 16
  %v138 = vld [vmem:[%s137] sm:$0xff]
  %v139 = vld [vmem:[%s137 + $0x8] sm:$0xff]
  %142 = vrot.lane.b32.xlu0 %v138, 16
  %v143 = vpop.permute.xlu0 %142
  %144 = vrot.lane.b32.xlu0 %v139, 16
  %v145 = vpop.permute.xlu0 %144
  %vm148 = vcmask 261248
  %149 = vst.msk [vmem:[#allocation2 + $0x10] sm:$0xff] %vm148, %v143
  %150 = vst.msk [vmem:[#allocation2 + $0x18] sm:$0xff] %vm148, %v145
  %s151 = scalar_lea.vmem %s1, 32
  %v152 = vld [vmem:[%s151] sm:$0xff]
  %v153 = vld [vmem:[%s151 + $0x8] sm:$0xff]
  %156 = vrot.lane.b32.xlu0 %v152, 32
  %v157 = vpop.permute.xlu0 %156
  %158 = vrot.lane.b32.xlu0 %v153, 32
  %v159 = vpop.permute.xlu0 %158
  %vm162 = vcmask 392448
  %163 = vst.msk [vmem:[#allocation2 + $0x20] sm:$0xff] %vm162, %v157
  %164 = vst.msk [vmem:[#allocation2 + $0x28] sm:$0xff] %vm162, %v159
  %s165 = scalar_lea.vmem %s1, 48
  %v166 = vld [vmem:[%s165] sm:$0xff]
  %v167 = vld [vmem:[%s165 + $0x8] sm:$0xff]
  %170 = vrot.lane.b32.xlu0 %v166, 48
  %v171 = vpop.permute.xlu0 %170
  %172 = vrot.lane.b32.xlu0 %v167, 48
  %v173 = vpop.permute.xlu0 %172
  %vm176 = vcmask 523648
  %177 = vst.msk [vmem:[#allocation2 + $0x30] sm:$0xff] %vm176, %v171
  %178 = vst.msk [vmem:[#allocation2 + $0x38] sm:$0xff] %vm176, %v173
  %v179 = vtanh.pop %v106
  %v180 = vtanh.pop %v111
  %v181 = vtanh.pop %v116
  %v182 = vtanh.pop %v121
  %v183 = vld [vmem:[#allocation2] sm:$0xff]
  %v184 = vld [vmem:[#allocation2 + $0x8] sm:$0xff]
  %v185 = vld [vmem:[#allocation2 + $0x10] sm:$0xff]
  %v186 = vld [vmem:[#allocation2 + $0x18] sm:$0xff]
  %v187 = vld [vmem:[#allocation2 + $0x20] sm:$0xff]
  %v188 = vld [vmem:[#allocation2 + $0x28] sm:$0xff]
  %v189 = vld [vmem:[#allocation2 + $0x30] sm:$0xff]
  %v190 = vld [vmem:[#allocation2 + $0x38] sm:$0xff]
  %v192 = vsel %vm124, %v179, 0
  %v195 = vsel %vm124, %v180, 0
  %v198 = vsel %vm124, %v181, 0
  %v201 = vsel %vm124, %v182, 0
  %203 = vmatprep.subr.mxu0 0.0
  %204 = vmatpush1.msra.mxu0 0.0
  %205 = vmatprep.subr.mxu0 0.0
  %206 = vmatpush1.msra.mxu0 0.0
  %207 = vmatprep.subr.mxu0 0.0
  %208 = vmatpush1.msra.mxu0 0.0
  %209 = vmatprep.subr.mxu0 0.0
  %210 = vmatpush1.msra.mxu0 0.0
  %211 = vmatprep.subr.mxu0 0.0
  %212 = vmatpush1.msra.mxu0 0.0
  %213 = vmatprep.subr.mxu0 0.0
  %214 = vmatpush1.msra.mxu0 0.0
  %215 = vmatprep.subr.mxu0 0.0
  %216 = vmatpush1.msra.mxu0 0.0
  %217 = vmatprep.subr.mxu0 0.0
  %218 = vmatpush1.msra.mxu0 0.0
  %219 = vmatprep.subr.mxu0 0.0
  %220 = vmatpush1.msra.mxu0 %v190
  %221 = vmatprep.subr.mxu0 0.0
  %222 = vmatpush1.msra.mxu0 %v189
  %223 = vmatprep.subr.mxu0 0.0
  %224 = vmatpush1.msra.mxu0 %v188
  %225 = vmatprep.subr.mxu0 0.0
  %226 = vmatpush1.msra.mxu0 %v187
  %227 = vmatprep.subr.mxu0 0.0
  %228 = vmatpush1.msra.mxu0 %v186
  %229 = vmatprep.subr.mxu0 0.0
  %230 = vmatpush1.msra.mxu0 %v185
  %231 = vmatprep.subr.mxu0 0.0
  %232 = vmatpush1.msra.mxu0 %v184
  %233 = vmatprep.subr.mxu0 0.0
  %234 = vmatpush1.msra.mxu0 %v183
  %235 = vmatprep.subr.mxu0 0.0
  %236 = vmatpush2.msra.mxu0 0.0
  %237 = vmatprep.subr.mxu0 0.0
  %238 = vmatpush2.msra.mxu0 0.0
  %239 = vmatprep.subr.mxu0 0.0
  %240 = vmatpush2.msra.mxu0 0.0
  %241 = vmatprep.subr.mxu0 0.0
  %242 = vmatpush2.msra.mxu0 0.0
  %243 = vmatprep.subr.mxu0 0.0
  %244 = vmatpush2.msra.mxu0 0.0
  %245 = vmatprep.subr.mxu0 0.0
  %246 = vmatpush2.msra.mxu0 0.0
  %247 = vmatprep.subr.mxu0 0.0
  %248 = vmatpush2.msra.mxu0 0.0
  %249 = vmatprep.subr.mxu0 0.0
  %250 = vmatpush2.msra.mxu0 0.0
  %251 = vmatprep.subr.mxu0 0.0
  %252 = vmatpush2.msra.mxu0 0.0
  %253 = vmatprep.subr.mxu0 0.0
  %254 = vmatpush2.msra.mxu0 0.0
  %255 = vmatprep.subr.mxu0 0.0
  %256 = vmatpush2.msra.mxu0 0.0
  %257 = vmatprep.subr.mxu0 0.0
  %258 = vmatpush2.msra.mxu0 0.0
  %259 = vmatprep.subr.mxu0 0.0
  %260 = vmatpush2.msra.mxu0 0.0
  %261 = vmatprep.subr.mxu0 0.0
  %262 = vmatpush2.msra.mxu0 0.0
  %263 = vmatprep.subr.mxu0 0.0
  %264 = vmatpush2.msra.mxu0 0.0
  %265 = vmatprep.subr.mxu0 0.0
  %266 = vmatpush2.msra.mxu0 0.0
  %267 = vmatprep.mubr.f32.mxu0 0.0
  %268 = vmatmul.mubr.f32.gmra.mxu0 %v192
  %v269 = vpop.f32.mrf.mxu0
  %v270 = vadd.f32 0.0, %v269
  %v271 = vpop.f32.mrf.mxu0
  %272 = vmatprep.mubr.f32.mxu0 0.0
  %273 = vmatmul.mubr.f32.gmra.mxu0 %v195
  %v274 = vpop.f32.mrf.mxu0
  %v275 = vadd.f32 0.0, %v274
  %v276 = vpop.f32.mrf.mxu0
  %277 = vmatprep.mubr.f32.mxu0 0.0
  %278 = vmatmul.mubr.f32.gmra.mxu0 %v198
  %v279 = vpop.f32.mrf.mxu0
  %v280 = vadd.f32 0.0, %v279
  %v281 = vpop.f32.mrf.mxu0
  %282 = vmatprep.mubr.f32.mxu0 0.0
  %283 = vmatmul.mubr.f32.gmra.mxu0 %v201
  %v284 = vpop.f32.mrf.mxu0
  %v285 = vadd.f32 0.0, %v284
  %v286 = vpop.f32.mrf.mxu0
  %287 = vdwg.mxu0
  %v288 = vld [vmem:[%s4] sm:$0xff]
  %v289 = vld [vmem:[%s4 + $0x8] sm:$0xff]
  %v290 = vld [vmem:[%s4 + $0x10] sm:$0xff]
  %v291 = vld [vmem:[%s4 + $0x18] sm:$0xff]
  %vm292 = vcmask 261120
  %v294 = vsel %vm292, %v288, 0
  %v297 = vsel %vm292, %v289, 0
  %v300 = vsel %vm292, %v290, 0
  %v303 = vsel %vm292, %v291, 0
  %305 = vmatprep.subr.mxu0 0.0
  %306 = vmatpush1.msra.mxu0 0.0
  %307 = vmatprep.subr.mxu0 0.0
  %308 = vmatpush1.msra.mxu0 0.0
  %309 = vmatprep.subr.mxu0 0.0
  %310 = vmatpush1.msra.mxu0 0.0
  %311 = vmatprep.subr.mxu0 0.0
  %312 = vmatpush1.msra.mxu0 0.0
  %313 = vmatprep.subr.mxu0 0.0
  %314 = vmatpush1.msra.mxu0 0.0
  %315 = vmatprep.subr.mxu0 0.0
  %316 = vmatpush1.msra.mxu0 0.0
  %317 = vmatprep.subr.mxu0 0.0
  %318 = vmatpush1.msra.mxu0 0.0
  %319 = vmatprep.subr.mxu0 0.0
  %320 = vmatpush1.msra.mxu0 0.0
  %321 = vmatprep.subr.mxu0 0.0
  %322 = vmatpush1.msra.mxu0 0.0
  %323 = vmatprep.subr.mxu0 0.0
  %324 = vmatpush1.msra.mxu0 0.0
  %325 = vmatprep.subr.mxu0 0.0
  %326 = vmatpush1.msra.mxu0 0.0
  %327 = vmatprep.subr.mxu0 0.0
  %328 = vmatpush1.msra.mxu0 0.0
  %329 = vmatprep.subr.mxu0 0.0
  %330 = vmatpush1.msra.mxu0 %v285
  %331 = vmatprep.subr.mxu0 0.0
  %332 = vmatpush1.msra.mxu0 %v280
  %333 = vmatprep.subr.mxu0 0.0
  %334 = vmatpush1.msra.mxu0 %v275
  %335 = vmatprep.subr.mxu0 0.0
  %336 = vmatpush1.msra.mxu0 %v270
  %337 = vmatprep.subr.mxu0 0.0
  %338 = vmatpush2.msra.mxu0 0.0
  %339 = vmatprep.subr.mxu0 0.0
  %340 = vmatpush2.msra.mxu0 0.0
  %341 = vmatprep.subr.mxu0 0.0
  %342 = vmatpush2.msra.mxu0 0.0
  %343 = vmatprep.subr.mxu0 0.0
  %344 = vmatpush2.msra.mxu0 0.0
  %345 = vmatprep.subr.mxu0 0.0
  %346 = vmatpush2.msra.mxu0 0.0
  %347 = vmatprep.subr.mxu0 0.0
  %348 = vmatpush2.msra.mxu0 0.0
  %349 = vmatprep.subr.mxu0 0.0
  %350 = vmatpush2.msra.mxu0 0.0
  %351 = vmatprep.subr.mxu0 0.0
  %352 = vmatpush2.msra.mxu0 0.0
  %353 = vmatprep.subr.mxu0 0.0
  %354 = vmatpush2.msra.mxu0 0.0
  %355 = vmatprep.subr.mxu0 0.0
  %356 = vmatpush2.msra.mxu0 0.0
  %357 = vmatprep.subr.mxu0 0.0
  %358 = vmatpush2.msra.mxu0 0.0
  %359 = vmatprep.subr.mxu0 0.0
  %360 = vmatpush2.msra.mxu0 0.0
  %361 = vmatprep.subr.mxu0 0.0
  %362 = vmatpush2.msra.mxu0 0.0
  %363 = vmatprep.subr.mxu0 0.0
  %364 = vmatpush2.msra.mxu0 0.0
  %365 = vmatprep.subr.mxu0 0.0
  %366 = vmatpush2.msra.mxu0 0.0
  %367 = vmatprep.subr.mxu0 0.0
  %368 = vmatpush2.msra.mxu0 0.0
  %369 = vmatprep.mubr.f32.mxu0 0.0
  %370 = vmatmul.mubr.f32.gmra.mxu0 %v294
  %v371 = vpop.f32.mrf.mxu0
  %v372 = vadd.f32 0.0, %v371
  %v373 = vpop.f32.mrf.mxu0
  %374 = vmatprep.mubr.f32.mxu0 0.0
  %375 = vmatmul.mubr.f32.gmra.mxu0 %v297
  %v376 = vpop.f32.mrf.mxu0
  %v377 = vadd.f32 0.0, %v376
  %v378 = vpop.f32.mrf.mxu0
  %379 = vmatprep.mubr.f32.mxu0 0.0
  %380 = vmatmul.mubr.f32.gmra.mxu0 %v300
  %v381 = vpop.f32.mrf.mxu0
  %v382 = vadd.f32 0.0, %v381
  %v383 = vpop.f32.mrf.mxu0
  %384 = vmatprep.mubr.f32.mxu0 0.0
  %385 = vmatmul.mubr.f32.gmra.mxu0 %v303
  %v386 = vpop.f32.mrf.mxu0
  %v387 = vadd.f32 0.0, %v386
  %v388 = vpop.f32.mrf.mxu0
  %389 = vdwg.mxu0
  %v390 = vmax.f32 %v372, 0.0
  %v391 = vmax.f32 %v377, 0.0
  %v392 = vmax.f32 %v382, 0.0
  %v393 = vmax.f32 %v387, 0.0
  %s394 = scalar_lea.vmem %s4, 32
  %v395 = vld [vmem:[%s394] sm:$0xff]
  %v396 = vld [vmem:[%s394 + $0x8] sm:$0xff]
  %v397 = vld [vmem:[%s394 + $0x10] sm:$0xff]
  %v398 = vld [vmem:[%s394 + $0x18] sm:$0xff]
  %v400 = vsel %vm292, %v395, 0
  %v403 = vsel %vm292, %v396, 0
  %v406 = vsel %vm292, %v397, 0
  %v409 = vsel %vm292, %v398, 0
  %411 = vmatprep.subr.mxu0 0.0
  %412 = vmatpush1.msra.mxu0 0.0
  %413 = vmatprep.subr.mxu0 0.0
  %414 = vmatpush1.msra.mxu0 0.0
  %415 = vmatprep.subr.mxu0 0.0
  %416 = vmatpush1.msra.mxu0 0.0
  %417 = vmatprep.subr.mxu0 0.0
  %418 = vmatpush1.msra.mxu0 0.0
  %419 = vmatprep.subr.mxu0 0.0
  %420 = vmatpush1.msra.mxu0 0.0
  %421 = vmatprep.subr.mxu0 0.0
  %422 = vmatpush1.msra.mxu0 0.0
  %423 = vmatprep.subr.mxu0 0.0
  %424 = vmatpush1.msra.mxu0 0.0
  %425 = vmatprep.subr.mxu0 0.0
  %426 = vmatpush1.msra.mxu0 0.0
  %427 = vmatprep.subr.mxu0 0.0
  %428 = vmatpush1.msra.mxu0 0.0
  %429 = vmatprep.subr.mxu0 0.0
  %430 = vmatpush1.msra.mxu0 0.0
  %431 = vmatprep.subr.mxu0 0.0
  %432 = vmatpush1.msra.mxu0 0.0
  %433 = vmatprep.subr.mxu0 0.0
  %434 = vmatpush1.msra.mxu0 0.0
  %435 = vmatprep.subr.mxu0 0.0
  %436 = vmatpush1.msra.mxu0 %v393
  %437 = vmatprep.subr.mxu0 0.0
  %438 = vmatpush1.msra.mxu0 %v392
  %439 = vmatprep.subr.mxu0 0.0
  %440 = vmatpush1.msra.mxu0 %v391
  %441 = vmatprep.subr.mxu0 0.0
  %442 = vmatpush1.msra.mxu0 %v390
  %443 = vmatprep.subr.mxu0 0.0
  %444 = vmatpush2.msra.mxu0 0.0
  %445 = vmatprep.subr.mxu0 0.0
  %446 = vmatpush2.msra.mxu0 0.0
  %447 = vmatprep.subr.mxu0 0.0
  %448 = vmatpush2.msra.mxu0 0.0
  %449 = vmatprep.subr.mxu0 0.0
  %450 = vmatpush2.msra.mxu0 0.0
  %451 = vmatprep.subr.mxu0 0.0
  %452 = vmatpush2.msra.mxu0 0.0
  %453 = vmatprep.subr.mxu0 0.0
  %454 = vmatpush2.msra.mxu0 0.0
  %455 = vmatprep.subr.mxu0 0.0
  %456 = vmatpush2.msra.mxu0 0.0
  %457 = vmatprep.subr.mxu0 0.0
  %458 = vmatpush2.msra.mxu0 0.0
  %459 = vmatprep.subr.mxu0 0.0
  %460 = vmatpush2.msra.mxu0 0.0
  %461 = vmatprep.subr.mxu0 0.0
  %462 = vmatpush2.msra.mxu0 0.0
  %463 = vmatprep.subr.mxu0 0.0
  %464 = vmatpush2.msra.mxu0 0.0
  %465 = vmatprep.subr.mxu0 0.0
  %466 = vmatpush2.msra.mxu0 0.0
  %467 = vmatprep.subr.mxu0 0.0
  %468 = vmatpush2.msra.mxu0 0.0
  %469 = vmatprep.subr.mxu0 0.0
  %470 = vmatpush2.msra.mxu0 0.0
  %471 = vmatprep.subr.mxu0 0.0
  %472 = vmatpush2.msra.mxu0 0.0
  %473 = vmatprep.subr.mxu0 0.0
  %474 = vmatpush2.msra.mxu0 0.0
  %475 = vmatprep.mubr.f32.mxu0 0.0
  %476 = vmatmul.mubr.f32.gmra.mxu0 %v400
  %v477 = vpop.f32.mrf.mxu0
  %v478 = vadd.f32 0.0, %v477
  %v479 = vpop.f32.mrf.mxu0
  %480 = vmatprep.mubr.f32.mxu0 0.0
  %481 = vmatmul.mubr.f32.gmra.mxu0 %v403
  %v482 = vpop.f32.mrf.mxu0
  %v483 = vadd.f32 0.0, %v482
  %v484 = vpop.f32.mrf.mxu0
  %485 = vmatprep.mubr.f32.mxu0 0.0
  %486 = vmatmul.mubr.f32.gmra.mxu0 %v406
  %v487 = vpop.f32.mrf.mxu0
  %v488 = vadd.f32 0.0, %v487
  %v489 = vpop.f32.mrf.mxu0
  %490 = vmatprep.mubr.f32.mxu0 0.0
  %491 = vmatmul.mubr.f32.gmra.mxu0 %v409
  %v492 = vpop.f32.mrf.mxu0
  %v493 = vadd.f32 0.0, %v492
  %v494 = vpop.f32.mrf.mxu0
  %495 = vdwg.mxu0
  %v496 = vadd.f32 %v106, %v478
  %v497 = vadd.f32 %v111, %v483
  %v498 = vadd.f32 %v116, %v488
  %v499 = vadd.f32 %v121, %v493
  %v500 = vtanh.pop %v496
  %v501 = vtanh.pop %v497
  %v502 = vtanh.pop %v498
  %v503 = vtanh.pop %v499
  %v505 = vsel %vm124, %v500, 0
  %v508 = vsel %vm124, %v501, 0
  %v511 = vsel %vm124, %v502, 0
  %v514 = vsel %vm124, %v503, 0
  %516 = vmatprep.subr.mxu0 0.0
  %517 = vmatpush1.msra.mxu0 0.0
  %518 = vmatprep.subr.mxu0 0.0
  %519 = vmatpush1.msra.mxu0 0.0
  %520 = vmatprep.subr.mxu0 0.0
  %521 = vmatpush1.msra.mxu0 0.0
  %522 = vmatprep.subr.mxu0 0.0
  %523 = vmatpush1.msra.mxu0 0.0
  %524 = vmatprep.subr.mxu0 0.0
  %525 = vmatpush1.msra.mxu0 0.0
  %526 = vmatprep.subr.mxu0 0.0
  %527 = vmatpush1.msra.mxu0 0.0
  %528 = vmatprep.subr.mxu0 0.0
  %529 = vmatpush1.msra.mxu0 0.0
  %530 = vmatprep.subr.mxu0 0.0
  %531 = vmatpush1.msra.mxu0 0.0
  %532 = vmatprep.subr.mxu0 0.0
  %533 = vmatpush1.msra.mxu0 %v190
  %534 = vmatprep.subr.mxu0 0.0
  %535 = vmatpush1.msra.mxu0 %v189
  %536 = vmatprep.subr.mxu0 0.0
  %537 = vmatpush1.msra.mxu0 %v188
  %538 = vmatprep.subr.mxu0 0.0
  %539 = vmatpush1.msra.mxu0 %v187
  %540 = vmatprep.subr.mxu0 0.0
  %541 = vmatpush1.msra.mxu0 %v186
  %542 = vmatprep.subr.mxu0 0.0
  %543 = vmatpush1.msra.mxu0 %v185
  %544 = vmatprep.subr.mxu0 0.0
  %545 = vmatpush1.msra.mxu0 %v184
  %546 = vmatprep.subr.mxu0 0.0
  %547 = vmatpush1.msra.mxu0 %v183
  %548 = vmatprep.subr.mxu0 0.0
  %549 = vmatpush2.msra.mxu0 0.0
  %550 = vmatprep.subr.mxu0 0.0
  %551 = vmatpush2.msra.mxu0 0.0
  %552 = vmatprep.subr.mxu0 0.0
  %553 = vmatpush2.msra.mxu0 0.0
  %554 = vmatprep.subr.mxu0 0.0
  %555 = vmatpush2.msra.mxu0 0.0
  %556 = vmatprep.subr.mxu0 0.0
  %557 = vmatpush2.msra.mxu0 0.0
  %558 = vmatprep.subr.mxu0 0.0
  %559 = vmatpush2.msra.mxu0 0.0
  %560 = vmatprep.subr.mxu0 0.0
  %561 = vmatpush2.msra.mxu0 0.0
  %562 = vmatprep.subr.mxu0 0.0
  %563 = vmatpush2.msra.mxu0 0.0
  %564 = vmatprep.subr.mxu0 0.0
  %565 = vmatpush2.msra.mxu0 0.0
  %566 = vmatprep.subr.mxu0 0.0
  %567 = vmatpush2.msra.mxu0 0.0
  %568 = vmatprep.subr.mxu0 0.0
  %569 = vmatpush2.msra.mxu0 0.0
  %570 = vmatprep.subr.mxu0 0.0
  %571 = vmatpush2.msra.mxu0 0.0
  %572 = vmatprep.subr.mxu0 0.0
  %573 = vmatpush2.msra.mxu0 0.0
  %574 = vmatprep.subr.mxu0 0.0
  %575 = vmatpush2.msra.mxu0 0.0
  %576 = vmatprep.subr.mxu0 0.0
  %577 = vmatpush2.msra.mxu0 0.0
  %578 = vmatprep.subr.mxu0 0.0
  %579 = vmatpush2.msra.mxu0 0.0
  %580 = vmatprep.mubr.f32.mxu0 0.0
  %581 = vmatmul.mubr.f32.gmra.mxu0 %v505
  %v582 = vpop.f32.mrf.mxu0
  %v583 = vadd.f32 0.0, %v582
  %v584 = vpop.f32.mrf.mxu0
  %585 = vmatprep.mubr.f32.mxu0 0.0
  %586 = vmatmul.mubr.f32.gmra.mxu0 %v508
  %v587 = vpop.f32.mrf.mxu0
  %v588 = vadd.f32 0.0, %v587
  %v589 = vpop.f32.mrf.mxu0
  %590 = vmatprep.mubr.f32.mxu0 0.0
  %591 = vmatmul.mubr.f32.gmra.mxu0 %v511
  %v592 = vpop.f32.mrf.mxu0
  %v593 = vadd.f32 0.0, %v592
  %v594 = vpop.f32.mrf.mxu0
  %595 = vmatprep.mubr.f32.mxu0 0.0
  %596 = vmatmul.mubr.f32.gmra.mxu0 %v514
  %v597 = vpop.f32.mrf.mxu0
  %v598 = vadd.f32 0.0, %v597
  %v599 = vpop.f32.mrf.mxu0
  %600 = vdwg.mxu0
  %601 = vmatprep.subr.mxu0 0.0
  %602 = vmatpush1.msra.mxu0 0.0
  %603 = vmatprep.subr.mxu0 0.0
  %604 = vmatpush1.msra.mxu0 0.0
  %605 = vmatprep.subr.mxu0 0.0
  %606 = vmatpush1.msra.mxu0 0.0
  %607 = vmatprep.subr.mxu0 0.0
  %608 = vmatpush1.msra.mxu0 0.0
  %609 = vmatprep.subr.mxu0 0.0
  %610 = vmatpush1.msra.mxu0 0.0
  %611 = vmatprep.subr.mxu0 0.0
  %612 = vmatpush1.msra.mxu0 0.0
  %613 = vmatprep.subr.mxu0 0.0
  %614 = vmatpush1.msra.mxu0 0.0
  %615 = vmatprep.subr.mxu0 0.0
  %616 = vmatpush1.msra.mxu0 0.0
  %617 = vmatprep.subr.mxu0 0.0
  %618 = vmatpush1.msra.mxu0 0.0
  %619 = vmatprep.subr.mxu0 0.0
  %620 = vmatpush1.msra.mxu0 0.0
  %621 = vmatprep.subr.mxu0 0.0
  %622 = vmatpush1.msra.mxu0 0.0
  %623 = vmatprep.subr.mxu0 0.0
  %624 = vmatpush1.msra.mxu0 0.0
  %625 = vmatprep.subr.mxu0 0.0
  %626 = vmatpush1.msra.mxu0 %v598
  %627 = vmatprep.subr.mxu0 0.0
  %628 = vmatpush1.msra.mxu0 %v593
  %629 = vmatprep.subr.mxu0 0.0
  %630 = vmatpush1.msra.mxu0 %v588
  %631 = vmatprep.subr.mxu0 0.0
  %632 = vmatpush1.msra.mxu0 %v583
  %633 = vmatprep.subr.mxu0 0.0
  %634 = vmatpush2.msra.mxu0 0.0
  %635 = vmatprep.subr.mxu0 0.0
  %636 = vmatpush2.msra.mxu0 0.0
  %637 = vmatprep.subr.mxu0 0.0
  %638 = vmatpush2.msra.mxu0 0.0
  %639 = vmatprep.subr.mxu0 0.0
  %640 = vmatpush2.msra.mxu0 0.0
  %641 = vmatprep.subr.mxu0 0.0
  %642 = vmatpush2.msra.mxu0 0.0
  %643 = vmatprep.subr.mxu0 0.0
  %644 = vmatpush2.msra.mxu0 0.0
  %645 = vmatprep.subr.mxu0 0.0
  %646 = vmatpush2.msra.mxu0 0.0
  %647 = vmatprep.subr.mxu0 0.0
  %648 = vmatpush2.msra.mxu0 0.0
  %649 = vmatprep.subr.mxu0 0.0
  %650 = vmatpush2.msra.mxu0 0.0
  %651 = vmatprep.subr.mxu0 0.0
  %652 = vmatpush2.msra.mxu0 0.0
  %653 = vmatprep.subr.mxu0 0.0
  %654 = vmatpush2.msra.mxu0 0.0
  %655 = vmatprep.subr.mxu0 0.0
  %656 = vmatpush2.msra.mxu0 0.0
  %657 = vmatprep.subr.mxu0 0.0
  %658 = vmatpush2.msra.mxu0 0.0
  %659 = vmatprep.subr.mxu0 0.0
  %660 = vmatpush2.msra.mxu0 0.0
  %661 = vmatprep.subr.mxu0 0.0
  %662 = vmatpush2.msra.mxu0 0.0
  %663 = vmatprep.subr.mxu0 0.0
  %664 = vmatpush2.msra.mxu0 0.0
  %665 = vmatprep.mubr.f32.mxu0 0.0
  %666 = vmatmul.mubr.f32.gmra.mxu0 %v294
  %v667 = vpop.f32.mrf.mxu0
  %v668 = vadd.f32 0.0, %v667
  %v669 = vpop.f32.mrf.mxu0
  %670 = vmatprep.mubr.f32.mxu0 0.0
  %671 = vmatmul.mubr.f32.gmra.mxu0 %v297
  %v672 = vpop.f32.mrf.mxu0
  %v673 = vadd.f32 0.0, %v672
  %v674 = vpop.f32.mrf.mxu0
  %675 = vmatprep.mubr.f32.mxu0 0.0
  %676 = vmatmul.mubr.f32.gmra.mxu0 %v300
  %v677 = vpop.f32.mrf.mxu0
  %v678 = vadd.f32 0.0, %v677
  %v679 = vpop.f32.mrf.mxu0
  %680 = vmatprep.mubr.f32.mxu0 0.0
  %681 = vmatmul.mubr.f32.gmra.mxu0 %v303
  %v682 = vpop.f32.mrf.mxu0
  %v683 = vadd.f32 0.0, %v682
  %v684 = vpop.f32.mrf.mxu0
  %685 = vdwg.mxu0
  %v686 = vmax.f32 %v668, 0.0
  %v687 = vmax.f32 %v673, 0.0
  %v688 = vmax.f32 %v678, 0.0
  %v689 = vmax.f32 %v683, 0.0
  %690 = vmatprep.subr.mxu0 0.0
  %691 = vmatpush1.msra.mxu0 0.0
  %692 = vmatprep.subr.mxu0 0.0
  %693 = vmatpush1.msra.mxu0 0.0
  %694 = vmatprep.subr.mxu0 0.0
  %695 = vmatpush1.msra.mxu0 0.0
  %696 = vmatprep.subr.mxu0 0.0
  %697 = vmatpush1.msra.mxu0 0.0
  %698 = vmatprep.subr.mxu0 0.0
  %699 = vmatpush1.msra.mxu0 0.0
  %700 = vmatprep.subr.mxu0 0.0
  %701 = vmatpush1.msra.mxu0 0.0
  %702 = vmatprep.subr.mxu0 0.0
  %703 = vmatpush1.msra.mxu0 0.0
  %704 = vmatprep.subr.mxu0 0.0
  %705 = vmatpush1.msra.mxu0 0.0
  %706 = vmatprep.subr.mxu0 0.0
  %707 = vmatpush1.msra.mxu0 0.0
  %708 = vmatprep.subr.mxu0 0.0
  %709 = vmatpush1.msra.mxu0 0.0
  %710 = vmatprep.subr.mxu0 0.0
  %711 = vmatpush1.msra.mxu0 0.0
  %712 = vmatprep.subr.mxu0 0.0
  %713 = vmatpush1.msra.mxu0 0.0
  %714 = vmatprep.subr.mxu0 0.0
  %715 = vmatpush1.msra.mxu0 %v689
  %716 = vmatprep.subr.mxu0 0.0
  %717 = vmatpush1.msra.mxu0 %v688
  %718 = vmatprep.subr.mxu0 0.0
  %719 = vmatpush1.msra.mxu0 %v687
  %720 = vmatprep.subr.mxu0 0.0
  %721 = vmatpush1.msra.mxu0 %v686
  %722 = vmatprep.subr.mxu0 0.0
  %723 = vmatpush2.msra.mxu0 0.0
  %724 = vmatprep.subr.mxu0 0.0
  %725 = vmatpush2.msra.mxu0 0.0
  %726 = vmatprep.subr.mxu0 0.0
  %727 = vmatpush2.msra.mxu0 0.0
  %728 = vmatprep.subr.mxu0 0.0
  %729 = vmatpush2.msra.mxu0 0.0
  %730 = vmatprep.subr.mxu0 0.0
  %731 = vmatpush2.msra.mxu0 0.0
  %732 = vmatprep.subr.mxu0 0.0
  %733 = vmatpush2.msra.mxu0 0.0
  %734 = vmatprep.subr.mxu0 0.0
  %735 = vmatpush2.msra.mxu0 0.0
  %736 = vmatprep.subr.mxu0 0.0
  %737 = vmatpush2.msra.mxu0 0.0
  %738 = vmatprep.subr.mxu0 0.0
  %739 = vmatpush2.msra.mxu0 0.0
  %740 = vmatprep.subr.mxu0 0.0
  %741 = vmatpush2.msra.mxu0 0.0
  %742 = vmatprep.subr.mxu0 0.0
  %743 = vmatpush2.msra.mxu0 0.0
  %744 = vmatprep.subr.mxu0 0.0
  %745 = vmatpush2.msra.mxu0 0.0
  %746 = vmatprep.subr.mxu0 0.0
  %747 = vmatpush2.msra.mxu0 0.0
  %748 = vmatprep.subr.mxu0 0.0
  %749 = vmatpush2.msra.mxu0 0.0
  %750 = vmatprep.subr.mxu0 0.0
  %751 = vmatpush2.msra.mxu0 0.0
  %752 = vmatprep.subr.mxu0 0.0
  %753 = vmatpush2.msra.mxu0 0.0
  %754 = vmatprep.mubr.f32.mxu0 0.0
  %755 = vmatmul.mubr.f32.gmra.mxu0 %v400
  %v756 = vpop.f32.mrf.mxu0
  %v757 = vadd.f32 0.0, %v756
  %v758 = vpop.f32.mrf.mxu0
  %759 = vmatprep.mubr.f32.mxu0 0.0
  %760 = vmatmul.mubr.f32.gmra.mxu0 %v403
  %v761 = vpop.f32.mrf.mxu0
  %v762 = vadd.f32 0.0, %v761
  %v763 = vpop.f32.mrf.mxu0
  %764 = vmatprep.mubr.f32.mxu0 0.0
  %765 = vmatmul.mubr.f32.gmra.mxu0 %v406
  %v766 = vpop.f32.mrf.mxu0
  %v767 = vadd.f32 0.0, %v766
  %v768 = vpop.f32.mrf.mxu0
  %769 = vmatprep.mubr.f32.mxu0 0.0
  %770 = vmatmul.mubr.f32.gmra.mxu0 %v409
  %v771 = vpop.f32.mrf.mxu0
  %v772 = vadd.f32 0.0, %v771
  %v773 = vpop.f32.mrf.mxu0
  %774 = vdwg.mxu0
  %v775 = vadd.f32 %v106, %v757
  %v776 = vadd.f32 %v111, %v762
  %v777 = vadd.f32 %v116, %v767
  %v778 = vadd.f32 %v121, %v772
  %v779 = vtanh.pop %v775
  %v780 = vtanh.pop %v776
  %v781 = vtanh.pop %v777
  %v782 = vtanh.pop %v778
  %v783 = vlaneseq
  %v784 = vshrl.u32 %v783, 7
  %v785 = vadd.s32 %v784, 8
  %v786 = vadd.s32 %v784, 16
  %v787 = vadd.s32 %v784, 24
  %v788 = vadd.s32 %v784, 32
  %v789 = vadd.s32 %v784, 40
  %v790 = vadd.s32 %v784, 48
  %v791 = vadd.s32 %v784, 56
  %v792 = vlaneseq
  %v793 = vand.u32 %v792, 127
  %v794 = vmul.u32 %v793, 16
  %vm795 = vcmp.ge.s32.totalorder %v784, %v794
  %vm796 = vcmp.ge.s32.totalorder %v785, %v794
  %vm797 = vcmp.ge.s32.totalorder %v786, %v794
  %vm798 = vcmp.ge.s32.totalorder %v787, %v794
  %vm799 = vcmp.ge.s32.totalorder %v788, %v794
  %vm800 = vcmp.ge.s32.totalorder %v789, %v794
  %vm801 = vcmp.ge.s32.totalorder %v790, %v794
  %vm802 = vcmp.ge.s32.totalorder %v791, %v794
  %v803 = vadd.s32 %v793, 1
  %v804 = vmul.u32 %v803, 16
  %vm805 = vcmp.lt.s32.totalorder %v784, %v804
  %vm806 = vcmp.lt.s32.totalorder %v785, %v804
  %vm807 = vcmp.lt.s32.totalorder %v786, %v804
  %vm808 = vcmp.lt.s32.totalorder %v787, %v804
  %vm809 = vcmp.lt.s32.totalorder %v788, %v804
  %vm810 = vcmp.lt.s32.totalorder %v789, %v804
  %vm811 = vcmp.lt.s32.totalorder %v790, %v804
  %vm812 = vcmp.lt.s32.totalorder %v791, %v804
  %vm813 = vmand %vm795, %vm805
  %vm814 = vmand %vm796, %vm806
  %vm815 = vmand %vm797, %vm807
  %vm816 = vmand %vm798, %vm808
  %vm817 = vmand %vm799, %vm809
  %vm818 = vmand %vm800, %vm810
  %vm819 = vmand %vm801, %vm811
  %vm820 = vmand %vm802, %vm812
  %v821 = vsel %vm813, 1.0, 0.0
  %v822 = vsel %vm814, 1.0, 0.0
  %v823 = vsel %vm815, 1.0, 0.0
  %v824 = vsel %vm816, 1.0, 0.0
  %v825 = vsel %vm817, 1.0, 0.0
  %v826 = vsel %vm818, 1.0, 0.0
  %v827 = vsel %vm819, 1.0, 0.0
  %v828 = vsel %vm820, 1.0, 0.0
  %v830 = vsel %vm124, %v779, 0
  %v833 = vsel %vm124, %v780, 0
  %v836 = vsel %vm124, %v781, 0
  %v839 = vsel %vm124, %v782, 0
  %841 = vmatprep.subr.mxu0 0.0
  %842 = vmatpush1.msra.mxu0 0.0
  %843 = vmatprep.subr.mxu0 0.0
  %844 = vmatpush1.msra.mxu0 0.0
  %845 = vmatprep.subr.mxu0 0.0
  %846 = vmatpush1.msra.mxu0 0.0
  %847 = vmatprep.subr.mxu0 0.0
  %848 = vmatpush1.msra.mxu0 0.0
  %849 = vmatprep.subr.mxu0 0.0
  %850 = vmatpush1.msra.mxu0 0.0
  %851 = vmatprep.subr.mxu0 0.0
  %852 = vmatpush1.msra.mxu0 0.0
  %853 = vmatprep.subr.mxu0 0.0
  %854 = vmatpush1.msra.mxu0 0.0
  %855 = vmatprep.subr.mxu0 0.0
  %856 = vmatpush1.msra.mxu0 0.0
  %857 = vmatprep.subr.mxu0 0.0
  %858 = vmatpush1.msra.mxu0 %v828
  %859 = vmatprep.subr.mxu0 0.0
  %860 = vmatpush1.msra.mxu0 %v827
  %861 = vmatprep.subr.mxu0 0.0
  %862 = vmatpush1.msra.mxu0 %v826
  %863 = vmatprep.subr.mxu0 0.0
  %864 = vmatpush1.msra.mxu0 %v825
  %865 = vmatprep.subr.mxu0 0.0
  %866 = vmatpush1.msra.mxu0 %v824
  %867 = vmatprep.subr.mxu0 0.0
  %868 = vmatpush1.msra.mxu0 %v823
  %869 = vmatprep.subr.mxu0 0.0
  %870 = vmatpush1.msra.mxu0 %v822
  %871 = vmatprep.subr.mxu0 0.0
  %872 = vmatpush1.msra.mxu0 %v821
  %873 = vmatprep.subr.mxu0 0.0
  %874 = vmatpush2.msra.mxu0 0.0
  %875 = vmatprep.subr.mxu0 0.0
  %876 = vmatpush2.msra.mxu0 0.0
  %877 = vmatprep.subr.mxu0 0.0
  %878 = vmatpush2.msra.mxu0 0.0
  %879 = vmatprep.subr.mxu0 0.0
  %880 = vmatpush2.msra.mxu0 0.0
  %881 = vmatprep.subr.mxu0 0.0
  %882 = vmatpush2.msra.mxu0 0.0
  %883 = vmatprep.subr.mxu0 0.0
  %884 = vmatpush2.msra.mxu0 0.0
  %885 = vmatprep.subr.mxu0 0.0
  %886 = vmatpush2.msra.mxu0 0.0
  %887 = vmatprep.subr.mxu0 0.0
  %888 = vmatpush2.msra.mxu0 0.0
  %889 = vmatprep.subr.mxu0 0.0
  %890 = vmatpush2.msra.mxu0 0.0
  %891 = vmatprep.subr.mxu0 0.0
  %892 = vmatpush2.msra.mxu0 0.0
  %893 = vmatprep.subr.mxu0 0.0
  %894 = vmatpush2.msra.mxu0 0.0
  %895 = vmatprep.subr.mxu0 0.0
  %896 = vmatpush2.msra.mxu0 0.0
  %897 = vmatprep.subr.mxu0 0.0
  %898 = vmatpush2.msra.mxu0 0.0
  %899 = vmatprep.subr.mxu0 0.0
  %900 = vmatpush2.msra.mxu0 0.0
  %901 = vmatprep.subr.mxu0 0.0
  %902 = vmatpush2.msra.mxu0 0.0
  %903 = vmatprep.subr.mxu0 0.0
  %904 = vmatpush2.msra.mxu0 0.0
  %905 = vmatprep.mubr.f32.mxu0 0.0
  %906 = vmatmul.mubr.f32.gmra.mxu0 %v830
  %v907 = vpop.f32.mrf.mxu0
  %v908 = vadd.f32 0.0, %v907
  %v909 = vpop.f32.mrf.mxu0
  %910 = vmatprep.mubr.f32.mxu0 0.0
  %911 = vmatmul.mubr.f32.gmra.mxu0 %v833
  %v912 = vpop.f32.mrf.mxu0
  %v913 = vadd.f32 0.0, %v912
  %v914 = vpop.f32.mrf.mxu0
  %915 = vmatprep.mubr.f32.mxu0 0.0
  %916 = vmatmul.mubr.f32.gmra.mxu0 %v836
  %v917 = vpop.f32.mrf.mxu0
  %v918 = vadd.f32 0.0, %v917
  %v919 = vpop.f32.mrf.mxu0
  %920 = vmatprep.mubr.f32.mxu0 0.0
  %921 = vmatmul.mubr.f32.gmra.mxu0 %v839
  %v922 = vpop.f32.mrf.mxu0
  %v923 = vadd.f32 0.0, %v922
  %v924 = vpop.f32.mrf.mxu0
  %925 = vdwg.mxu0
  %v926 = vld [vmem:[%s3] sm:$0xff]
  %v927 = vld [vmem:[%s3 + $0x8] sm:$0xff]
  %v928 = vld [vmem:[%s3 + $0x10] sm:$0xff]
  %v929 = vld [vmem:[%s3 + $0x18] sm:$0xff]
  %v931 = vsel %vm292, %v926, 0
  %v934 = vsel %vm292, %v927, 0
  %v937 = vsel %vm292, %v928, 0
  %v940 = vsel %vm292, %v929, 0
  %942 = vmatprep.subr.mxu0 0.0
  %943 = vmatpush1.msra.mxu0 0.0
  %944 = vmatprep.subr.mxu0 0.0
  %945 = vmatpush1.msra.mxu0 0.0
  %946 = vmatprep.subr.mxu0 0.0
  %947 = vmatpush1.msra.mxu0 0.0
  %948 = vmatprep.subr.mxu0 0.0
  %949 = vmatpush1.msra.mxu0 0.0
  %950 = vmatprep.subr.mxu0 0.0
  %951 = vmatpush1.msra.mxu0 0.0
  %952 = vmatprep.subr.mxu0 0.0
  %953 = vmatpush1.msra.mxu0 0.0
  %954 = vmatprep.subr.mxu0 0.0
  %955 = vmatpush1.msra.mxu0 0.0
  %956 = vmatprep.subr.mxu0 0.0
  %957 = vmatpush1.msra.mxu0 0.0
  %958 = vmatprep.subr.mxu0 0.0
  %959 = vmatpush1.msra.mxu0 0.0
  %960 = vmatprep.subr.mxu0 0.0
  %961 = vmatpush1.msra.mxu0 0.0
  %962 = vmatprep.subr.mxu0 0.0
  %963 = vmatpush1.msra.mxu0 0.0
  %964 = vmatprep.subr.mxu0 0.0
  %965 = vmatpush1.msra.mxu0 0.0
  %966 = vmatprep.subr.mxu0 0.0
  %967 = vmatpush1.msra.mxu0 %v923
  %968 = vmatprep.subr.mxu0 0.0
  %969 = vmatpush1.msra.mxu0 %v918
  %970 = vmatprep.subr.mxu0 0.0
  %971 = vmatpush1.msra.mxu0 %v913
  %972 = vmatprep.subr.mxu0 0.0
  %973 = vmatpush1.msra.mxu0 %v908
  %974 = vmatprep.subr.mxu0 0.0
  %975 = vmatpush2.msra.mxu0 0.0
  %976 = vmatprep.subr.mxu0 0.0
  %977 = vmatpush2.msra.mxu0 0.0
  %978 = vmatprep.subr.mxu0 0.0
  %979 = vmatpush2.msra.mxu0 0.0
  %980 = vmatprep.subr.mxu0 0.0
  %981 = vmatpush2.msra.mxu0 0.0
  %982 = vmatprep.subr.mxu0 0.0
  %983 = vmatpush2.msra.mxu0 0.0
  %984 = vmatprep.subr.mxu0 0.0
  %985 = vmatpush2.msra.mxu0 0.0
  %986 = vmatprep.subr.mxu0 0.0
  %987 = vmatpush2.msra.mxu0 0.0
  %988 = vmatprep.subr.mxu0 0.0
  %989 = vmatpush2.msra.mxu0 0.0
  %990 = vmatprep.subr.mxu0 0.0
  %991 = vmatpush2.msra.mxu0 0.0
  %992 = vmatprep.subr.mxu0 0.0
  %993 = vmatpush2.msra.mxu0 0.0
  %994 = vmatprep.subr.mxu0 0.0
  %995 = vmatpush2.msra.mxu0 0.0
  %996 = vmatprep.subr.mxu0 0.0
  %997 = vmatpush2.msra.mxu0 0.0
  %998 = vmatprep.subr.mxu0 0.0
  %999 = vmatpush2.msra.mxu0 0.0
  %1000 = vmatprep.subr.mxu0 0.0
  %1001 = vmatpush2.msra.mxu0 0.0
  %1002 = vmatprep.subr.mxu0 0.0
  %1003 = vmatpush2.msra.mxu0 0.0
  %1004 = vmatprep.subr.mxu0 0.0
  %1005 = vmatpush2.msra.mxu0 0.0
  %1006 = vmatprep.mubr.f32.mxu0 0.0
  %1007 = vmatmul.mubr.f32.gmra.mxu0 %v931
  %v1008 = vpop.f32.mrf.mxu0
  %v1009 = vadd.f32 0.0, %v1008
  %v1010 = vpop.f32.mrf.mxu0
  %1011 = vmatprep.mubr.f32.mxu0 0.0
  %1012 = vmatmul.mubr.f32.gmra.mxu0 %v934
  %v1013 = vpop.f32.mrf.mxu0
  %v1014 = vadd.f32 0.0, %v1013
  %v1015 = vpop.f32.mrf.mxu0
  %1016 = vmatprep.mubr.f32.mxu0 0.0
  %1017 = vmatmul.mubr.f32.gmra.mxu0 %v937
  %v1018 = vpop.f32.mrf.mxu0
  %v1019 = vadd.f32 0.0, %v1018
  %v1020 = vpop.f32.mrf.mxu0
  %1021 = vmatprep.mubr.f32.mxu0 0.0
  %1022 = vmatmul.mubr.f32.gmra.mxu0 %v940
  %v1023 = vpop.f32.mrf.mxu0
  %v1024 = vadd.f32 0.0, %v1023
  %v1025 = vpop.f32.mrf.mxu0
  %1026 = vdwg.mxu0
  %1027 = vst [vmem:[%s5] sm:$0xff] %v1009
  %1028 = vst [vmem:[%s5 + $0x8] sm:$0xff] %v1014
  %1029 = vst [vmem:[%s5 + $0x10] sm:$0xff] %v1019
  %1030 = vst [vmem:[%s5 + $0x18] sm:$0xff] %v1024
  // Predicated region
  $region22: #{gemimi_forward.1} parent=0 // pred_check
    _
  $region23: #{gemimi_forward.1} parent=0 // pred_check_branch
    %1032 = sbr.rel (0) target = $region25
  $region24: #{gemimi_forward.1} parent=0 // pred_region
    _
  $region25: #{gemimi_forward.1} parent=0 // pred_fallthru
    _
  // Predicated region
  $region26: #{gemimi_forward.1} parent=0 // pred_check
    _
  $region27: #{gemimi_forward.1} parent=0 // pred_check_branch
    %1034 = sbr.rel (0) target = $region29
  $region28: #{gemimi_forward.1} parent=0 // pred_region
    _
  $region29: #{gemimi_forward.1} parent=0 // pred_fallthru
    _

</llo_original>
